<compile_context>
chip_gen: v7x
topology: tpu7x:2x2x1
jax: 0.10.0
libtpu: 0.0.40
codegen_flags: <defaults>
</compile_context>

<pallas_src>
import jax
import jax.numpy as jnp
from jax.experimental import pallas as pl
from jax.experimental.pallas import tpu as pltpu

_LANES = 512  # lane-dense last dim (4 x 128) -> full-width, unmasked vst


def _identity_kernel(x_ref, o_ref):
    # Abstract NeuralNetwork.forward: no parameters, no transform.
    o_ref[...] = x_ref[...]


def _block_target_bytes():
    """Per-block byte target, tuned per TPU generation."""
    try:
        kind = jax.devices()[0].device_kind.lower()
    except Exception:
        kind = ""
    if "7" in kind:
        # v7x: 3.2 TB/s HBM -> 8 MiB blocks keep the ~0.35us/step cost ~5%.
        return 8 * 1024 * 1024
    # v5e/v6e: ~85% of HBM roofline already reached at 1-4 MiB blocks.
    return 4 * 1024 * 1024


def _plan(total, itemsize):
    """Choose (rows, tile_rows, needs_pad) for a [rows, _LANES] slab."""
    sublane = max(8, 32 // itemsize)  # packed sublane minimum per dtype
    rows = -(-total // _LANES)        # ceil-div
    needs_pad = (rows * _LANES != total)
    if needs_pad:
        # Pad rows only to the sublane multiple — never to a tile multiple —
        # so at most a few KiB of junk gets written/re-read.
        rows = -(-rows // sublane) * sublane

    target_rows = max(sublane, _block_target_bytes() // (_LANES * itemsize))
    target_rows = (target_rows // sublane) * sublane

    if rows % sublane == 0:
        tile_rows = min(target_rows, rows)
        # v7x has 2 TensorCores: ensure >= 2 grid blocks whenever the row
        # count allows it so the "parallel" axis actually shards.
        if tile_rows >= rows and rows >= 2 * sublane:
            tile_rows = -(-(rows // 2) // sublane) * sublane
    else:
        # Only reachable on the no-pad fast path: either the whole slab is one
        # (legal, full-dim) block, or tile with a sublane-multiple block and
        # let Pallas handle the partial last block.
        tile_rows = rows if rows <= target_rows else target_rows
    return rows, tile_rows, needs_pad


def neural_network_forward(x):
    """Pallas implementation of NeuralNetwork.forward (abstract -> identity).

    Accepts a tensor of any shape/dtype (e.g. NCHW), runs the pass-through
    inside a Pallas TPU kernel, and returns an identical tensor.
    """
    orig_shape = x.shape
    orig_dtype = x.dtype
    itemsize = jnp.dtype(orig_dtype).itemsize

    total = 1
    for d in orig_shape:
        total *= d

    rows, tile_rows, needs_pad = _plan(total, itemsize)

    if needs_pad:
        # Rare path (element count not a multiple of 512): pad the tail only.
        flat = x.reshape(-1)
        flat = jnp.pad(flat, (0, rows * _LANES - total))
        x2d = flat.reshape(rows, _LANES)
    else:
        # Common path: contiguous reshape is a free bitcast — no pad, no extra
        # HBM copies outside the kernel (2x tensor bytes total traffic).
        x2d = x.reshape(rows, _LANES)

    grid = (-(-rows // tile_rows),)
    tile_bytes = tile_rows * _LANES * itemsize
    slab_bytes = rows * _LANES * itemsize

    out2d = pl.pallas_call(
        _identity_kernel,
        out_shape=jax.ShapeDtypeStruct((rows, _LANES), orig_dtype),
        grid_spec=pltpu.PrefetchScalarGridSpec(
            num_scalar_prefetch=0,
            grid=grid,
            in_specs=[pl.BlockSpec((tile_rows, _LANES), lambda i: (i, 0))],
            out_specs=pl.BlockSpec((tile_rows, _LANES), lambda i: (i, 0)),
        ),
        compiler_params=pltpu.CompilerParams(
            dimension_semantics=("parallel",),
            # Double-buffered in + out blocks (4 x tile) plus headroom; stays
            # well under v7x's 64 MiB physical VMEM even with 8 MiB tiles and
            # raises v5e's 16 MiB scoped default.
            vmem_limit_bytes=max(32 * 1024 * 1024,
                                 4 * tile_bytes + 4 * 1024 * 1024),
        ),
        cost_estimate=pl.CostEstimate(
            flops=0,
            transcendentals=0,
            bytes_accessed=2 * slab_bytes,
        ),
        # No input_output_aliases: on the fast path the kernel sees the
        # caller's buffer directly; aliasing would donate it, which is unsafe
        # when the caller keeps using x afterwards.
    )(x2d)

    if needs_pad:
        return out2d.reshape(-1)[:total].reshape(orig_shape)
    return out2d.reshape(orig_shape)


if __name__ == "__main__":
    key = jax.random.PRNGKey(0)

    # Small NCHW input consistent with a CycleGAN-style image network.
    x = jax.random.normal(key, (2, 4, 16, 16), dtype=jnp.float32)
    y = jax.block_until_ready(neural_network_forward(x))
    assert y.shape == x.shape and y.dtype == x.dtype
    assert bool(jnp.allclose(y, x))

    # Lane-divisible shape that produces a multi-block grid (fast path, >= 2
    # blocks so both v7x TensorCores get work).
    x1 = jax.random.normal(key, (2, 4, 64, 64), dtype=jnp.float32)
    y1 = jax.block_until_ready(neural_network_forward(x1))
    assert y1.shape == x1.shape and bool(jnp.allclose(y1, x1))

    # Element count NOT a multiple of 512 -> tail-pad path (pad only to the
    # sublane multiple, never a tile multiple).
    x2 = jax.random.normal(key, (3, 3, 5, 7), dtype=jnp.float32)
    y2 = jax.block_until_ready(neural_network_forward(x2))
    assert y2.shape == x2.shape and bool(jnp.allclose(y2, x2))

    print("KERNEL_OK")
</pallas_src>

<mosaic_0001>
module attributes {stable_mosaic.version = 11 : i64} {
  func.func @_identity_kernel(%arg0: i32, %arg1: memref<4x512xf32, #tpu.memory_space<vmem>>, %arg2: memref<4x512xf32, #tpu.memory_space<vmem>>) attributes {dimension_semantics = [#tpu.dimension_semantics<parallel>], iteration_bounds = array<i64: 1>, scalar_prefetch = 0 : i64, scratch_operands = 0 : i64, tpu.core_type = #tpu.core_type<tc>, window_params = [{transform_indices = @transform_0, window_bounds = array<i64: 4, 512>}, {transform_indices = @transform_1, window_bounds = array<i64: 4, 512>}]} {
    %c0 = arith.constant 0 : index
    %c0_0 = arith.constant 0 : index
    %0 = vector.load %arg1[%c0, %c0_0] : memref<4x512xf32, #tpu.memory_space<vmem>>, vector<4x512xf32>
    %c0_1 = arith.constant 0 : index
    %c0_2 = arith.constant 0 : index
    %1 = vector.load %arg2[%c0_1, %c0_2] : memref<4x512xf32, #tpu.memory_space<vmem>>, vector<4x512xf32>
    tpu.vector_store %arg2[%c0_1, %c0_2], %0 {strides = array<i32>} : memref<4x512xf32, #tpu.memory_space<vmem>>, vector<4x512xf32>,
    return
  }
  func.func @transform_0(%arg0: i32) -> (i32, i32) {
    %c0_i32 = arith.constant 0 : i32
    %c0_i32_0 = arith.constant 0 : i32
    return %arg0, %c0_i32 : i32, i32
  }
  func.func @transform_1(%arg0: i32) -> (i32, i32) {
    %c0_i32 = arith.constant 0 : i32
    %c0_i32_0 = arith.constant 0 : i32
    return %arg0, %c0_i32 : i32, i32
  }
}

</mosaic_0001>

<llo_original>
// kernel: tpu_custom_call.1
$region0: #{tpu_custom_call.1}
  #allocation0 [shape = 'u32[]', space=smem, size = 0x4, offset = 0x4, fixed_abs, tag = 'smem constant byte address 0x4 - core index']
  #allocation1 [shape = 'u32[144,128]{1,0:T(1,128)}', space=vmem, size = 0x12000, scoped, tag = 'internal scratch']
  %s0 = inlined_call_operand.hbm [shape: f32[4,512], index: 0, kind: input, shape index: {}]
  %s1 = inlined_call_operand.hbm [shape: f32[4,512], index: 1, kind: output, shape index: {}]
  %s2 = sld [smem:[#allocation0]]
  $region18: #{tpu_custom_call.1} parent=0
    _
  %s4 = ssub.s32 1, %s2
  %s5 = scalar_select 0, %s4, %s2
  $region1: #{tpu_custom_call.1} parent=0
    #allocation2 [shape = 'u8[8192]{0}', space=vmem, size = 0x2000, scoped, tag = 'input window, operand 0, single buffered']
    #allocation3 [shape = 's32[1]{0}', space=sflag, size = 0x4, scoped, tag = 'scoped memory for tpu_custom_call.1']
    #allocation4 [shape = 's32[1]{0}', space=sflag, size = 0x4, scoped, tag = 'scoped memory for tpu_custom_call.1']
    #allocation5 [shape = 'u8[8192]{0}', space=vmem, size = 0x2000, scoped, tag = 'output window, operand 0, single buffered']
    %6 = vsyncpa [#allocation3], 0
    %7 = vsyncpa [#allocation4], 0
    // Predicated region
    $region2: #{tpu_custom_call.1} parent=1 // pred_check
      _
    $region3: #{tpu_custom_call.1} parent=1 // pred_check_branch
      %9 = sbr.rel (0) target = $region5
    $region4: #{tpu_custom_call.1} parent=1 // pred_region
      %s11 = ssub.s32 256, 256
      %12 = vsyncadd [#allocation3], %s11
      %s14 = sshll.u32 [#allocation2], 4
      %s15 = int_to_ptr.vmem [resolvable:$true] %s14
      %17 = dma.hbm_to_vmem [thread:$0]  %s0, 256, %s15, [#allocation3]
    $region5: #{tpu_custom_call.1} parent=1 // pred_fallthru
      _
    // Predicated region
    $region6: #{tpu_custom_call.1} parent=1 // pred_check
      _
    $region7: #{tpu_custom_call.1} parent=1 // pred_check_branch
      %19 = sbr.rel (0) target = $region9
    $region8: #{tpu_custom_call.1} parent=1 // pred_region
      %20 = dma.done [#allocation3], 256
    $region9: #{tpu_custom_call.1} parent=1 // pred_fallthru
      _
    %v21 = vld [vmem:[#allocation2] sm:$0xff]
    %v22 = vld [vmem:[#allocation2 + $0x8] sm:$0xff]
    %23 = vst [vmem:[#allocation5] sm:$0xff] %v21
    %24 = vst [vmem:[#allocation5 + $0x8] sm:$0xff] %v22
    // Predicated region
    $region10: #{tpu_custom_call.1} parent=1 // pred_check
      _
    $region11: #{tpu_custom_call.1} parent=1 // pred_check_branch
      %26 = sbr.rel (0) target = $region13
    $region12: #{tpu_custom_call.1} parent=1 // pred_region
      %s28 = ssub.s32 256, 256
      %29 = vsyncadd [#allocation4], %s28
      %s31 = sshll.u32 [#allocation5], 4
      %s32 = int_to_ptr.vmem [resolvable:$true] %s31
      %34 = dma.vmem_to_hbm [thread:$0]  %s32, 256, %s1, [#allocation4]
    $region13: #{tpu_custom_call.1} parent=1 // pred_fallthru
      _
    // Predicated region
    $region14: #{tpu_custom_call.1} parent=1 // pred_check
      _
    $region15: #{tpu_custom_call.1} parent=1 // pred_check_branch
      %36 = sbr.rel (0) target = $region17
    $region16: #{tpu_custom_call.1} parent=1 // pred_region
      %37 = dma.done [#allocation4], 256
    $region17: #{tpu_custom_call.1} parent=1 // pred_fallthru
      _
    %38 = vsyncpa [#allocation3], 1
    %39 = vsyncpa [#allocation4], 1

</llo_original>
